<compile_context>
chip_gen: v7x
topology: tpu7x:2x2x1
jax: 0.10.0
libtpu: 0.0.40
codegen_flags: <defaults>
</compile_context>

<pallas_src>
import functools

import jax
import jax.numpy as jnp
import numpy as np
from jax import lax
from jax.experimental import pallas as pl
from jax.experimental.pallas import tpu as pltpu

_CP = 8            # channel tile: one 8-sublane group
_K_TAPS = 9        # 3x3 taps
_KB = _K_TAPS + 1  # + one block for the folded bias -> K = 80 (8-aligned)
_MAX_B_TILE = 8    # images packed per grid step along the lane axis


def _pick_batch_tile(n):
    """Largest divisor of n that is <= _MAX_B_TILE (keeps the grid exact)."""
    for d in range(min(n, _MAX_B_TILE), 0, -1):
        if n % d == 0:
            return d
    return 1


def _build_const_block(H, W, b_tile):
    """(80, b_tile*H*W) f32 compile-time constant.

    Rows [8k, 8k+8): validity mask of 3x3 tap k (replicated over the 8
    sublanes so the in-kernel multiply needs no broadcast).  Rows 72..79:
    [ones; zeros*7], used to fold the conv bias into the MXU matmul.
    """
    HW = H * W
    pos = np.arange(HW)
    y, x = pos // W, pos % W
    blk = np.zeros((_KB * _CP, HW), np.float32)
    for kh in range(3):
        for kw in range(3):
            k = kh * 3 + kw
            dh, dw = kh - 1, kw - 1
            valid = ((y + dh >= 0) & (y + dh < H)
                     & (x + dw >= 0) & (x + dw < W)).astype(np.float32)
            blk[k * _CP:(k + 1) * _CP, :] = valid[None, :]
    blk[_K_TAPS * _CP, :] = 1.0  # ones row -> bias tap
    return np.tile(blk, (1, b_tile))


# ----------------------------------------------------------------------------
# Fused Pallas kernel: executes children[0:final_layer] for B_TILE images
# ----------------------------------------------------------------------------
def _fused_backbone_kernel(const_ref, x_ref, *refs, ops, W, HW, b_tile, c_out):
    """Layout: channels on sublanes, B_TILE*H*W packed on the lane axis.

    const_ref: (80, L)            tap masks (x8 sublanes) + bias block
    x_ref    : (B_TILE, Cin, HW)  input images (no channel padding)
    per conv : w_ref (8, 80)      [cout, tap*8 + cin | bias | 0*7]
    out_ref  : (B_TILE, Cout, HW)
    ops      : static tuple of "conv" | "conv_relu" | "relu"
    """
    out_ref = refs[-1]
    w_refs = refs[:-1]
    L = b_tile * HW

    # Pack this step's images along the lane axis: (Cin, B_TILE*HW).
    # 256-lane-aligned static concat == pure vreg placement (no transpose).
    h = jnp.concatenate([x_ref[b] for b in range(b_tile)], axis=1)
    h = h.astype(jnp.float32)

    consts = const_ref[...]                           # (80, L), fetched once
    bias_blk = consts[_K_TAPS * _CP:_KB * _CP, :]     # [ones; zeros*7]

    wi = 0
    for op in ops:
        if op in ("conv", "conv_relu"):
            w_ref = w_refs[wi]
            wi += 1
            c = h.shape[0]
            if c < _CP:  # zero-extend channels in vregs (no host pad pass)
                h = jnp.concatenate(
                    [h, jnp.zeros((_CP - c, L), jnp.float32)], axis=0)
            pieces = []
            for kh in range(3):
                for kw in range(3):
                    k = kh * 3 + kw
                    dh, dw = kh - 1, kw - 1
                    shift = (-(dh * W + dw)) % L
                    p = h if shift == 0 else pltpu.roll(h, shift=shift, axis=1)
                    if dh != 0 or dw != 0:
                        # Zeroes SAME-padding taps AND the roll wrap-around
                        # between images packed along the lane axis.
                        p = p * consts[k * _CP:(k + 1) * _CP, :]
                    pieces.append(p)
            pieces.append(bias_blk)                   # bias folded into matmul
            stacked = jnp.concatenate(pieces, axis=0)             # (80, L)
            # TODO(synk): bf16 stacked/weights on v6e/v7x for realistic sizes;
            # on v5e optionally split K=80 into 3 accumulating matmuls.
            h = jnp.dot(w_ref[...], stacked,
                        preferred_element_type=jnp.float32)       # (8, L)
            if op == "conv_relu":                     # fused ReLU epilogue
                h = jnp.maximum(h, 0.0)
        elif op == "relu":
            h = jnp.maximum(h, 0.0)
        else:
            raise ValueError(f"unsupported fused op: {op}")

    # Unpack lanes back to per-image slabs: static 256-lane-aligned slices,
    # lane-dense unmasked stores.
    for b in range(b_tile):
        out_ref[b] = h[:c_out, b * HW:(b + 1) * HW].astype(out_ref.dtype)


# ----------------------------------------------------------------------------
# Wrapper: one pallas_call for the whole child chain
# ----------------------------------------------------------------------------
def _pack_conv_weight(w_hwio, b):
    """(3,3,cin,cout) HWIO + (cout,) -> (8, 80) [cout, tap*8+cin | bias | 0*7]."""
    cin, cout = w_hwio.shape[2], w_hwio.shape[3]
    w_p = jnp.pad(w_hwio, ((0, 0), (0, 0), (0, _CP - cin), (0, _CP - cout)))
    wmat = jnp.transpose(w_p.reshape(_K_TAPS, _CP, _CP),
                         (2, 0, 1)).reshape(_CP, _K_TAPS * _CP)
    b_col = jnp.pad(b, (0, _CP - cout)).reshape(_CP, 1)
    return jnp.concatenate(
        [wmat, b_col, jnp.zeros((_CP, _CP - 1), wmat.dtype)], axis=1)


@functools.partial(jax.jit, static_argnames=("ops",))
def _fused_forward(x_nchw, conv_params, *, ops):
    """x_nchw: (N, Cin, H, W).  Executes the fused op program in one kernel."""
    N, Cin, H, W = x_nchw.shape
    HW = H * W
    b_tile = _pick_batch_tile(N)
    L = b_tile * HW
    c_out = conv_params[-1][0].shape[3] if conv_params else Cin

    packed_ws = [_pack_conv_weight(w, b) for (w, b) in conv_params]
    consts = jnp.asarray(_build_const_block(H, W, b_tile))  # trace-time const
    x3 = x_nchw.reshape(N, Cin, HW)                         # free reshape

    in_specs = [pl.BlockSpec((_KB * _CP, L), lambda n: (0, 0)),        # consts
                pl.BlockSpec((b_tile, Cin, HW), lambda n: (n, 0, 0))]  # images
    in_specs += [pl.BlockSpec((_CP, _KB * _CP), lambda n: (0, 0))
                 for _ in packed_ws]

    kernel = functools.partial(_fused_backbone_kernel, ops=tuple(ops), W=W,
                               HW=HW, b_tile=b_tile, c_out=c_out)

    n_conv = len(packed_ws)
    itemsize = x_nchw.dtype.itemsize
    cost = pl.CostEstimate(
        flops=2 * N * HW * (_KB * _CP) * _CP * max(n_conv, 1),
        transcendentals=0,
        bytes_accessed=((x3.size + N * c_out * HW) * itemsize
                        + consts.size * 4
                        + sum(w.size * 4 for w in packed_ws)))

    out = pl.pallas_call(
        kernel,
        out_shape=jax.ShapeDtypeStruct((N, c_out, HW), x_nchw.dtype),
        grid=(N // b_tile,),
        in_specs=in_specs,
        out_specs=pl.BlockSpec((b_tile, c_out, HW), lambda n: (n, 0, 0)),
        compiler_params=pltpu.CompilerParams(
            dimension_semantics=("parallel",),       # shard steps over TCs
            vmem_limit_bytes=32 * 1024 * 1024),      # explicit, v7x-safe
        cost_estimate=cost,
    )(consts, x3, *packed_ws)
    return out.reshape(N, c_out, H, W)


# ----------------------------------------------------------------------------
# "Children" (nn.Module equivalents) and the inner model
# ----------------------------------------------------------------------------
class Conv3x3Child:
    """3x3 same-padding conv parameters (HWIO weights)."""

    def __init__(self, w_hwio, b):
        self.w = w_hwio
        self.b = b

    def __repr__(self):
        return f"Conv3x3({self.w.shape[2]} -> {self.w.shape[3]}, pad=1)"


class ReLUChild:
    def __repr__(self):
        return "ReLU()"


class SimpleConvModel:
    """Inner model: Conv(4->8) -> ReLU -> Conv(8->8) -> ReLU."""

    def __init__(self, in_channels=4, mid_channels=8, out_channels=8):
        k1, k2 = jax.random.split(jax.random.PRNGKey(42))
        w1 = jax.random.normal(k1, (3, 3, in_channels, mid_channels),
                               jnp.float32) * (1.0 / np.sqrt(9 * in_channels))
        b1 = jnp.zeros((mid_channels,), jnp.float32)
        w2 = jax.random.normal(k2, (3, 3, mid_channels, out_channels),
                               jnp.float32) * (1.0 / np.sqrt(9 * mid_channels))
        b2 = jnp.full((out_channels,), 0.1, jnp.float32)
        self._children = [Conv3x3Child(w1, b1), ReLUChild(),
                          Conv3x3Child(w2, b2), ReLUChild()]
        self.output_channels = out_channels

    def children(self):
        return list(self._children)


# ----------------------------------------------------------------------------
# Backbone — faithful port of the PyTorch wrapper semantics (fused execution)
# ----------------------------------------------------------------------------
class Backbone:
    def __init__(self, args, model, final_layer=None):
        self.args = args
        self.model = model
        self.model_children = list(self.model.children())
        self.final_layer = final_layer
        if self.final_layer is None:
            self.final_layer = len(self.model_children)
        if self.final_layer != 0:
            if self.final_layer < 0:
                self.final_layer = len(self.model_children) + final_layer
            # (informational prints from the torch module omitted to keep
            #  stdout limited to the required success marker)
        self.output_channels = self.model.output_channels

    def forward(self, x, final_layer=None):
        """x is NCHW (PyTorch convention)."""
        if final_layer is None:
            if self.final_layer is not None:
                final_layer = self.final_layer
            else:
                final_layer = len(self.model_children) + 1
        if final_layer < 0:
            final_layer = len(self.model_children) + final_layer

        children = list(self.model.children())[:final_layer]
        if not children:
            return x  # matches the PyTorch early-return for final_layer == 0

        # Build the fused op program; conv immediately followed by relu fuses
        # into "conv_relu" (ReLU runs in the conv epilogue).
        ops, conv_params = [], []
        i = 0
        while i < len(children):
            c = children[i]
            if isinstance(c, Conv3x3Child):
                fuse = (i + 1 < len(children)
                        and isinstance(children[i + 1], ReLUChild))
                ops.append("conv_relu" if fuse else "conv")
                conv_params.append((c.w, c.b))
                i += 2 if fuse else 1
            elif isinstance(c, ReLUChild):
                ops.append("relu")
                i += 1
            else:
                # TODO(synk): extend the fused kernel for other child types.
                raise NotImplementedError(f"unsupported child {c!r}")

        return _fused_forward(x, tuple(conv_params), ops=tuple(ops))


# ----------------------------------------------------------------------------
# Reference (pure JAX) for correctness checking
# ----------------------------------------------------------------------------
def _ref_forward(x_nchw, model, final_layer):
    children = list(model.children())
    if final_layer < 0:
        final_layer = len(children) + final_layer
    x = x_nchw
    for cc, child in enumerate(children):
        if cc >= final_layer:
            break
        if isinstance(child, Conv3x3Child):
            x = lax.conv_general_dilated(
                x, child.w, window_strides=(1, 1), padding="SAME",
                dimension_numbers=("NCHW", "HWIO", "NCHW"))
            x = x + child.b.reshape(1, -1, 1, 1)
        else:
            x = jnp.maximum(x, 0.0)
    return x


# ----------------------------------------------------------------------------
if __name__ == "__main__":
    # Small deterministic input, PyTorch NCHW convention.
    x = jax.random.normal(jax.random.PRNGKey(0), (2, 4, 16, 16), jnp.float32)

    model = SimpleConvModel(in_channels=4, mid_channels=8, out_channels=8)
    backbone = Backbone(args=None, model=model, final_layer=-1)

    # Configured path: conv1 -> relu -> conv2 (stops before the final ReLU).
    out = jax.block_until_ready(backbone.forward(x))
    ref = _ref_forward(x, model, final_layer=-1)
    np.testing.assert_allclose(np.asarray(out), np.asarray(ref),
                               rtol=1e-4, atol=1e-4)

    # Full chain (conv_relu, conv_relu) exercises the other fused path.
    out_full = jax.block_until_ready(backbone.forward(x, final_layer=4))
    ref_full = _ref_forward(x, model, final_layer=4)
    np.testing.assert_allclose(np.asarray(out_full), np.asarray(ref_full),
                               rtol=1e-4, atol=1e-4)

    print("KERNEL_OK")
</pallas_src>

<mosaic_0001>
module attributes {stable_mosaic.version = 11 : i64} {
  func.func @_fused_backbone_kernel(%arg0: i32, %arg1: memref<80x512xf32, #tpu.memory_space<vmem>>, %arg2: memref<2x4x256xf32, #tpu.memory_space<vmem>>, %arg3: memref<8x80xf32, #tpu.memory_space<vmem>>, %arg4: memref<8x80xf32, #tpu.memory_space<vmem>>, %arg5: memref<2x8x256xf32, #tpu.memory_space<vmem>>) attributes {dimension_semantics = [#tpu.dimension_semantics<parallel>], iteration_bounds = array<i64: 1>, scalar_prefetch = 0 : i64, scratch_operands = 0 : i64, tpu.core_type = #tpu.core_type<tc>, window_params = [{pipeline_mode = #tpu.pipeline_mode<synchronous>, transform_indices = @transform_0, window_bounds = array<i64: 80, 512>}, {transform_indices = @transform_1, window_bounds = array<i64: 2, 4, 256>}, {pipeline_mode = #tpu.pipeline_mode<synchronous>, transform_indices = @transform_2, window_bounds = array<i64: 8, 80>}, {pipeline_mode = #tpu.pipeline_mode<synchronous>, transform_indices = @transform_3, window_bounds = array<i64: 8, 80>}, {transform_indices = @transform_4, window_bounds = array<i64: 2, 8, 256>}]} {
    %c0 = arith.constant 0 : index
    %c0_0 = arith.constant 0 : index
    %c0_1 = arith.constant 0 : index
    %0 = vector.load %arg2[%c0, %c0_0, %c0_1] : memref<2x4x256xf32, #tpu.memory_space<vmem>>, vector<1x4x256xf32>
    %1 = vector.shape_cast %0 : vector<1x4x256xf32> to vector<4x256xf32>
    %c1 = arith.constant 1 : index
    %c0_2 = arith.constant 0 : index
    %c0_3 = arith.constant 0 : index
    %2 = vector.load %arg2[%c1, %c0_2, %c0_3] : memref<2x4x256xf32, #tpu.memory_space<vmem>>, vector<1x4x256xf32>
    %3 = vector.shape_cast %2 : vector<1x4x256xf32> to vector<4x256xf32>
    %4 = tpu.concatenate %1, %3 in 1 : vector<4x256xf32>, vector<4x256xf32> -> vector<4x512xf32>
    %c0_4 = arith.constant 0 : index
    %c0_5 = arith.constant 0 : index
    %5 = vector.load %arg1[%c0_4, %c0_5] : memref<80x512xf32, #tpu.memory_space<vmem>>, vector<80x512xf32>
    %6 = vector.extract_strided_slice %5 {offsets = [72, 0], sizes = [8, 512], strides = [1, 1]} : vector<80x512xf32> to vector<8x512xf32>
    %cst = arith.constant 0.000000e+00 : f32
    %7 = vector.broadcast %cst : f32 to vector<4x512xf32>
    %8 = tpu.concatenate %4, %7 in 0 : vector<4x512xf32>, vector<4x512xf32> -> vector<8x512xf32>
    %c17_i32 = arith.constant 17 : i32
    %9 = tpu.dynamic_rotate %8 by %c17_i32 dim 1 : vector<8x512xf32>, i32 -> vector<8x512xf32>
    %10 = vector.extract_strided_slice %5 {offsets = [0, 0], sizes = [8, 512], strides = [1, 1]} : vector<80x512xf32> to vector<8x512xf32>
    %11 = arith.mulf %9, %10 : vector<8x512xf32>
    %c16_i32 = arith.constant 16 : i32
    %12 = tpu.dynamic_rotate %8 by %c16_i32 dim 1 : vector<8x512xf32>, i32 -> vector<8x512xf32>
    %13 = vector.extract_strided_slice %5 {offsets = [8, 0], sizes = [8, 512], strides = [1, 1]} : vector<80x512xf32> to vector<8x512xf32>
    %14 = arith.mulf %12, %13 : vector<8x512xf32>
    %c15_i32 = arith.constant 15 : i32
    %15 = tpu.dynamic_rotate %8 by %c15_i32 dim 1 : vector<8x512xf32>, i32 -> vector<8x512xf32>
    %16 = vector.extract_strided_slice %5 {offsets = [16, 0], sizes = [8, 512], strides = [1, 1]} : vector<80x512xf32> to vector<8x512xf32>
    %17 = arith.mulf %15, %16 : vector<8x512xf32>
    %c1_i32 = arith.constant 1 : i32
    %18 = tpu.dynamic_rotate %8 by %c1_i32 dim 1 : vector<8x512xf32>, i32 -> vector<8x512xf32>
    %19 = vector.extract_strided_slice %5 {offsets = [24, 0], sizes = [8, 512], strides = [1, 1]} : vector<80x512xf32> to vector<8x512xf32>
    %20 = arith.mulf %18, %19 : vector<8x512xf32>
    %c511_i32 = arith.constant 511 : i32
    %21 = tpu.dynamic_rotate %8 by %c511_i32 dim 1 : vector<8x512xf32>, i32 -> vector<8x512xf32>
    %22 = vector.extract_strided_slice %5 {offsets = [40, 0], sizes = [8, 512], strides = [1, 1]} : vector<80x512xf32> to vector<8x512xf32>
    %23 = arith.mulf %21, %22 : vector<8x512xf32>
    %c497_i32 = arith.constant 497 : i32
    %24 = tpu.dynamic_rotate %8 by %c497_i32 dim 1 : vector<8x512xf32>, i32 -> vector<8x512xf32>
    %25 = vector.extract_strided_slice %5 {offsets = [48, 0], sizes = [8, 512], strides = [1, 1]} : vector<80x512xf32> to vector<8x512xf32>
    %26 = arith.mulf %24, %25 : vector<8x512xf32>
    %c496_i32 = arith.constant 496 : i32
    %27 = tpu.dynamic_rotate %8 by %c496_i32 dim 1 : vector<8x512xf32>, i32 -> vector<8x512xf32>
    %28 = vector.extract_strided_slice %5 {offsets = [56, 0], sizes = [8, 512], strides = [1, 1]} : vector<80x512xf32> to vector<8x512xf32>
    %29 = arith.mulf %27, %28 : vector<8x512xf32>
    %c495_i32 = arith.constant 495 : i32
    %30 = tpu.dynamic_rotate %8 by %c495_i32 dim 1 : vector<8x512xf32>, i32 -> vector<8x512xf32>
    %31 = vector.extract_strided_slice %5 {offsets = [64, 0], sizes = [8, 512], strides = [1, 1]} : vector<80x512xf32> to vector<8x512xf32>
    %32 = arith.mulf %30, %31 : vector<8x512xf32>
    %33 = tpu.concatenate %11, %14, %17, %20, %8, %23, %26, %29, %32, %6 in 0 : vector<8x512xf32>, vector<8x512xf32>, vector<8x512xf32>, vector<8x512xf32>, vector<8x512xf32>, vector<8x512xf32>, vector<8x512xf32>, vector<8x512xf32>, vector<8x512xf32>, vector<8x512xf32> -> vector<80x512xf32>
    %c0_6 = arith.constant 0 : index
    %c0_7 = arith.constant 0 : index
    %34 = vector.load %arg3[%c0_6, %c0_7] : memref<8x80xf32, #tpu.memory_space<vmem>>, vector<8x80xf32>
    %cst_8 = arith.constant dense<0.000000e+00> : vector<8x512xf32>
    %35 = tpu.matmul %34, %33, %cst_8 {dimension_numbers = #tpu.dot_dimension_numbers<[1], [0], [0], [1], [0, 0, 1, 1], [], []>} : vector<8x80xf32>, vector<80x512xf32>, vector<8x512xf32> -> vector<8x512xf32>
    %cst_9 = arith.constant 0.000000e+00 : f32
    %36 = vector.broadcast %cst_9 : f32 to vector<8x512xf32>
    %37 = arith.maximumf %35, %36 : vector<8x512xf32>
    %c17_i32_10 = arith.constant 17 : i32
    %38 = tpu.dynamic_rotate %37 by %c17_i32_10 dim 1 : vector<8x512xf32>, i32 -> vector<8x512xf32>
    %39 = vector.extract_strided_slice %5 {offsets = [0, 0], sizes = [8, 512], strides = [1, 1]} : vector<80x512xf32> to vector<8x512xf32>
    %40 = arith.mulf %38, %39 : vector<8x512xf32>
    %c16_i32_11 = arith.constant 16 : i32
    %41 = tpu.dynamic_rotate %37 by %c16_i32_11 dim 1 : vector<8x512xf32>, i32 -> vector<8x512xf32>
    %42 = vector.extract_strided_slice %5 {offsets = [8, 0], sizes = [8, 512], strides = [1, 1]} : vector<80x512xf32> to vector<8x512xf32>
    %43 = arith.mulf %41, %42 : vector<8x512xf32>
    %c15_i32_12 = arith.constant 15 : i32
    %44 = tpu.dynamic_rotate %37 by %c15_i32_12 dim 1 : vector<8x512xf32>, i32 -> vector<8x512xf32>
    %45 = vector.extract_strided_slice %5 {offsets = [16, 0], sizes = [8, 512], strides = [1, 1]} : vector<80x512xf32> to vector<8x512xf32>
    %46 = arith.mulf %44, %45 : vector<8x512xf32>
    %c1_i32_13 = arith.constant 1 : i32
    %47 = tpu.dynamic_rotate %37 by %c1_i32_13 dim 1 : vector<8x512xf32>, i32 -> vector<8x512xf32>
    %48 = vector.extract_strided_slice %5 {offsets = [24, 0], sizes = [8, 512], strides = [1, 1]} : vector<80x512xf32> to vector<8x512xf32>
    %49 = arith.mulf %47, %48 : vector<8x512xf32>
    %c511_i32_14 = arith.constant 511 : i32
    %50 = tpu.dynamic_rotate %37 by %c511_i32_14 dim 1 : vector<8x512xf32>, i32 -> vector<8x512xf32>
    %51 = vector.extract_strided_slice %5 {offsets = [40, 0], sizes = [8, 512], strides = [1, 1]} : vector<80x512xf32> to vector<8x512xf32>
    %52 = arith.mulf %50, %51 : vector<8x512xf32>
    %c497_i32_15 = arith.constant 497 : i32
    %53 = tpu.dynamic_rotate %37 by %c497_i32_15 dim 1 : vector<8x512xf32>, i32 -> vector<8x512xf32>
    %54 = vector.extract_strided_slice %5 {offsets = [48, 0], sizes = [8, 512], strides = [1, 1]} : vector<80x512xf32> to vector<8x512xf32>
    %55 = arith.mulf %53, %54 : vector<8x512xf32>
    %c496_i32_16 = arith.constant 496 : i32
    %56 = tpu.dynamic_rotate %37 by %c496_i32_16 dim 1 : vector<8x512xf32>, i32 -> vector<8x512xf32>
    %57 = vector.extract_strided_slice %5 {offsets = [56, 0], sizes = [8, 512], strides = [1, 1]} : vector<80x512xf32> to vector<8x512xf32>
    %58 = arith.mulf %56, %57 : vector<8x512xf32>
    %c495_i32_17 = arith.constant 495 : i32
    %59 = tpu.dynamic_rotate %37 by %c495_i32_17 dim 1 : vector<8x512xf32>, i32 -> vector<8x512xf32>
    %60 = vector.extract_strided_slice %5 {offsets = [64, 0], sizes = [8, 512], strides = [1, 1]} : vector<80x512xf32> to vector<8x512xf32>
    %61 = arith.mulf %59, %60 : vector<8x512xf32>
    %62 = tpu.concatenate %40, %43, %46, %49, %37, %52, %55, %58, %61, %6 in 0 : vector<8x512xf32>, vector<8x512xf32>, vector<8x512xf32>, vector<8x512xf32>, vector<8x512xf32>, vector<8x512xf32>, vector<8x512xf32>, vector<8x512xf32>, vector<8x512xf32>, vector<8x512xf32> -> vector<80x512xf32>
    %c0_18 = arith.constant 0 : index
    %c0_19 = arith.constant 0 : index
    %63 = vector.load %arg4[%c0_18, %c0_19] : memref<8x80xf32, #tpu.memory_space<vmem>>, vector<8x80xf32>
    %cst_20 = arith.constant dense<0.000000e+00> : vector<8x512xf32>
    %64 = tpu.matmul %63, %62, %cst_20 {dimension_numbers = #tpu.dot_dimension_numbers<[1], [0], [0], [1], [0, 0, 1, 1], [], []>} : vector<8x80xf32>, vector<80x512xf32>, vector<8x512xf32> -> vector<8x512xf32>
    %65 = vector.extract_strided_slice %64 {offsets = [0, 0], sizes = [8, 256], strides = [1, 1]} : vector<8x512xf32> to vector<8x256xf32>
    %c0_21 = arith.constant 0 : index
    %c0_22 = arith.constant 0 : index
    %c0_23 = arith.constant 0 : index
    %66 = vector.load %arg5[%c0_21, %c0_22, %c0_23] : memref<2x8x256xf32, #tpu.memory_space<vmem>>, vector<1x8x256xf32>
    %67 = vector.shape_cast %66 : vector<1x8x256xf32> to vector<8x256xf32>
    %68 = vector.shape_cast %65 : vector<8x256xf32> to vector<1x8x256xf32>
    tpu.vector_store %arg5[%c0_21, %c0_22, %c0_23], %68 {strides = array<i32>} : memref<2x8x256xf32, #tpu.memory_space<vmem>>, vector<1x8x256xf32>,
    %69 = vector.extract_strided_slice %64 {offsets = [0, 256], sizes = [8, 256], strides = [1, 1]} : vector<8x512xf32> to vector<8x256xf32>
    %c1_24 = arith.constant 1 : index
    %c0_25 = arith.constant 0 : index
    %c0_26 = arith.constant 0 : index
    %70 = vector.load %arg5[%c1_24, %c0_25, %c0_26] : memref<2x8x256xf32, #tpu.memory_space<vmem>>, vector<1x8x256xf32>
    %71 = vector.shape_cast %70 : vector<1x8x256xf32> to vector<8x256xf32>
    %72 = vector.shape_cast %69 : vector<8x256xf32> to vector<1x8x256xf32>
    tpu.vector_store %arg5[%c1_24, %c0_25, %c0_26], %72 {strides = array<i32>} : memref<2x8x256xf32, #tpu.memory_space<vmem>>, vector<1x8x256xf32>,
    return
  }
  func.func @transform_0(%arg0: i32) -> (i32, i32) {
    %c0_i32 = arith.constant 0 : i32
    %c0_i32_0 = arith.constant 0 : i32
    %c0_i32_1 = arith.constant 0 : i32
    return %c0_i32, %c0_i32_0 : i32, i32
  }
  func.func @transform_1(%arg0: i32) -> (i32, i32, i32) {
    %c0_i32 = arith.constant 0 : i32
    %c0_i32_0 = arith.constant 0 : i32
    %c0_i32_1 = arith.constant 0 : i32
    return %arg0, %c0_i32, %c0_i32_0 : i32, i32, i32
  }
  func.func @transform_2(%arg0: i32) -> (i32, i32) {
    %c0_i32 = arith.constant 0 : i32
    %c0_i32_0 = arith.constant 0 : i32
    %c0_i32_1 = arith.constant 0 : i32
    return %c0_i32, %c0_i32_0 : i32, i32
  }
  func.func @transform_3(%arg0: i32) -> (i32, i32) {
    %c0_i32 = arith.constant 0 : i32
    %c0_i32_0 = arith.constant 0 : i32
    %c0_i32_1 = arith.constant 0 : i32
    return %c0_i32, %c0_i32_0 : i32, i32
  }
  func.func @transform_4(%arg0: i32) -> (i32, i32, i32) {
    %c0_i32 = arith.constant 0 : i32
    %c0_i32_0 = arith.constant 0 : i32
    %c0_i32_1 = arith.constant 0 : i32
    return %arg0, %c0_i32, %c0_i32_0 : i32, i32, i32
  }
}

</mosaic_0001>

<llo_original>
// kernel: _fused_forward.1
$region0: #{_fused_forward.1}
  #allocation0 [shape = 'u32[]', space=smem, size = 0x4, offset = 0x4, fixed_abs, tag = 'smem constant byte address 0x4 - core index']
  #allocation1 [shape = 'u32[144,128]{1,0:T(1,128)}', space=vmem, size = 0x12000, scoped, tag = 'internal scratch']
  %s0 = inlined_call_operand.vmem [shape: f32[80,512], index: 0, kind: input, shape index: {}]
  %s1 = inlined_call_operand.vmem [shape: f32[2,4,256], index: 1, kind: input, shape index: {}]
  %s2 = inlined_call_operand.vmem [shape: f32[8,80], index: 2, kind: input, shape index: {}]
  %s3 = inlined_call_operand.vmem [shape: f32[8,80], index: 3, kind: input, shape index: {}]
  %s4 = inlined_call_operand.vmem [shape: f32[2,8,256], index: 4, kind: output, shape index: {}]
  %s5 = sld [smem:[#allocation0]]
  $region26: #{_fused_forward.1} parent=0
    _
  %s7 = ssub.s32 1, %s5
  %s8 = scalar_select 0, %s7, %s5
  // Predicated region
  $region2: #{_fused_forward.1} parent=0 // pred_check
    _
  $region3: #{_fused_forward.1} parent=0 // pred_check_branch
    %10 = sbr.rel (0) target = $region5
  $region4: #{_fused_forward.1} parent=0 // pred_region
    _
  $region5: #{_fused_forward.1} parent=0 // pred_fallthru
    _
  // Predicated region
  $region6: #{_fused_forward.1} parent=0 // pred_check
    _
  $region7: #{_fused_forward.1} parent=0 // pred_check_branch
    %12 = sbr.rel (0) target = $region9
  $region8: #{_fused_forward.1} parent=0 // pred_region
    _
  $region9: #{_fused_forward.1} parent=0 // pred_fallthru
    _
  // Predicated region
  $region10: #{_fused_forward.1} parent=0 // pred_check
    _
  $region11: #{_fused_forward.1} parent=0 // pred_check_branch
    %14 = sbr.rel (0) target = $region13
  $region12: #{_fused_forward.1} parent=0 // pred_region
    _
  $region13: #{_fused_forward.1} parent=0 // pred_fallthru
    _
  // Predicated region
  $region14: #{_fused_forward.1} parent=0 // pred_check
    _
  $region15: #{_fused_forward.1} parent=0 // pred_check_branch
    %16 = sbr.rel (0) target = $region17
  $region16: #{_fused_forward.1} parent=0 // pred_region
    _
  $region17: #{_fused_forward.1} parent=0 // pred_fallthru
    _
  %v17 = vld [vmem:[%s1] sm:$0xff]
  %s18 = scalar_lea.vmem %s1, 8
  %v19 = vld [vmem:[%s18] sm:$0xff]
  %v21 = vcombine.high %v17, %v17
  %v24 = vcombine.high %v19, %v19
  %v26 = vld [vmem:[%s0] sm:$0xff]
  %v27 = vld [vmem:[%s0 + $0x8] sm:$0xff]
  %v28 = vld [vmem:[%s0 + $0x10] sm:$0xff]
  %v29 = vld [vmem:[%s0 + $0x18] sm:$0xff]
  %v30 = vld [vmem:[%s0 + $0x20] sm:$0xff]
  %v31 = vld [vmem:[%s0 + $0x28] sm:$0xff]
  %v32 = vld [vmem:[%s0 + $0x30] sm:$0xff]
  %v33 = vld [vmem:[%s0 + $0x38] sm:$0xff]
  %v34 = vld [vmem:[%s0 + $0x40] sm:$0xff]
  %v35 = vld [vmem:[%s0 + $0x48] sm:$0xff]
  %v36 = vld [vmem:[%s0 + $0x50] sm:$0xff]
  %v37 = vld [vmem:[%s0 + $0x58] sm:$0xff]
  %v38 = vld [vmem:[%s0 + $0x60] sm:$0xff]
  %v39 = vld [vmem:[%s0 + $0x68] sm:$0xff]
  %v40 = vld [vmem:[%s0 + $0x70] sm:$0xff]
  %v41 = vld [vmem:[%s0 + $0x78] sm:$0xff]
  %v42 = vld [vmem:[%s0 + $0xa0] sm:$0xff]
  %v43 = vld [vmem:[%s0 + $0xa8] sm:$0xff]
  %v44 = vld [vmem:[%s0 + $0xb0] sm:$0xff]
  %v45 = vld [vmem:[%s0 + $0xb8] sm:$0xff]
  %v46 = vld [vmem:[%s0 + $0xc0] sm:$0xff]
  %v47 = vld [vmem:[%s0 + $0xc8] sm:$0xff]
  %v48 = vld [vmem:[%s0 + $0xd0] sm:$0xff]
  %v49 = vld [vmem:[%s0 + $0xd8] sm:$0xff]
  %v50 = vld [vmem:[%s0 + $0xe0] sm:$0xff]
  %v51 = vld [vmem:[%s0 + $0xe8] sm:$0xff]
  %v52 = vld [vmem:[%s0 + $0xf0] sm:$0xff]
  %v53 = vld [vmem:[%s0 + $0xf8] sm:$0xff]
  %v54 = vld [vmem:[%s0 + $0x100] sm:$0xff]
  %v55 = vld [vmem:[%s0 + $0x108] sm:$0xff]
  %v56 = vld [vmem:[%s0 + $0x110] sm:$0xff]
  %v57 = vld [vmem:[%s0 + $0x118] sm:$0xff]
  %v58 = vld [vmem:[%s0 + $0x120] sm:$0xff]
  %v59 = vld [vmem:[%s0 + $0x128] sm:$0xff]
  %v60 = vld [vmem:[%s0 + $0x130] sm:$0xff]
  %v61 = vld [vmem:[%s0 + $0x138] sm:$0xff]
  %vm62 = vcmask 1043456
  %v63 = vsel %vm62, %v17, 0.0
  %v64 = vsel %vm62, %v21, 0.0
  %v65 = vsel %vm62, %v19, 0.0
  %v66 = vsel %vm62, %v24, 0.0
  %67 = vrot.lane.b32.xlu0 %v63, 17
  %v68 = vpop.permute.xlu0 %67
  %69 = vrot.lane.b32.xlu0 %v64, 17
  %v70 = vpop.permute.xlu0 %69
  %71 = vrot.lane.b32.xlu0 %v65, 17
  %v72 = vpop.permute.xlu0 %71
  %73 = vrot.lane.b32.xlu0 %v66, 17
  %v74 = vpop.permute.xlu0 %73
  %v75 = vlaneseq
  %v76 = vand.u32 %v75, 127
  %vm77 = vcmp.lt.s32.totalorder %v76, 17
  %v78 = vsel %vm77, %v72, %v74
  %v79 = vsel %vm77, %v70, %v72
  %v80 = vsel %vm77, %v68, %v70
  %v81 = vsel %vm77, %v74, %v68
  %v82 = vmul.f32 %v81, %v26
  %v83 = vmul.f32 %v80, %v27
  %v84 = vmul.f32 %v79, %v28
  %v85 = vmul.f32 %v78, %v29
  %86 = vrot.lane.b32.xlu0 %v63, 16
  %v87 = vpop.permute.xlu0 %86
  %88 = vrot.lane.b32.xlu0 %v64, 16
  %v89 = vpop.permute.xlu0 %88
  %90 = vrot.lane.b32.xlu0 %v65, 16
  %v91 = vpop.permute.xlu0 %90
  %92 = vrot.lane.b32.xlu0 %v66, 16
  %v93 = vpop.permute.xlu0 %92
  %vm94 = vcmp.lt.s32.totalorder %v76, 16
  %v95 = vsel %vm94, %v91, %v93
  %v96 = vsel %vm94, %v89, %v91
  %v97 = vsel %vm94, %v87, %v89
  %v98 = vsel %vm94, %v93, %v87
  %v99 = vmul.f32 %v98, %v30
  %v100 = vmul.f32 %v97, %v31
  %v101 = vmul.f32 %v96, %v32
  %v102 = vmul.f32 %v95, %v33
  %103 = vrot.lane.b32.xlu0 %v63, 15
  %v104 = vpop.permute.xlu0 %103
  %105 = vrot.lane.b32.xlu0 %v64, 15
  %v106 = vpop.permute.xlu0 %105
  %107 = vrot.lane.b32.xlu0 %v65, 15
  %v108 = vpop.permute.xlu0 %107
  %109 = vrot.lane.b32.xlu0 %v66, 15
  %v110 = vpop.permute.xlu0 %109
  %vm111 = vcmp.lt.s32.totalorder %v76, 15
  %v112 = vsel %vm111, %v108, %v110
  %v113 = vsel %vm111, %v106, %v108
  %v114 = vsel %vm111, %v104, %v106
  %v115 = vsel %vm111, %v110, %v104
  %v116 = vmul.f32 %v115, %v34
  %v117 = vmul.f32 %v114, %v35
  %v118 = vmul.f32 %v113, %v36
  %v119 = vmul.f32 %v112, %v37
  %120 = vrot.lane.b32.xlu0 %v63, 1
  %v121 = vpop.permute.xlu0 %120
  %122 = vrot.lane.b32.xlu0 %v64, 1
  %v123 = vpop.permute.xlu0 %122
  %124 = vrot.lane.b32.xlu0 %v65, 1
  %v125 = vpop.permute.xlu0 %124
  %126 = vrot.lane.b32.xlu0 %v66, 1
  %v127 = vpop.permute.xlu0 %126
  %vm128 = vcmp.lt.s32.totalorder %v76, 1
  %v129 = vsel %vm128, %v125, %v127
  %v130 = vsel %vm128, %v123, %v125
  %v131 = vsel %vm128, %v121, %v123
  %v132 = vsel %vm128, %v127, %v121
  %v133 = vmul.f32 %v132, %v38
  %v134 = vmul.f32 %v131, %v39
  %v135 = vmul.f32 %v130, %v40
  %v136 = vmul.f32 %v129, %v41
  %137 = vrot.lane.b32.xlu0 %v63, 127
  %v138 = vpop.permute.xlu0 %137
  %139 = vrot.lane.b32.xlu0 %v64, 127
  %v140 = vpop.permute.xlu0 %139
  %141 = vrot.lane.b32.xlu0 %v65, 127
  %v142 = vpop.permute.xlu0 %141
  %143 = vrot.lane.b32.xlu0 %v66, 127
  %v144 = vpop.permute.xlu0 %143
  %vm145 = vcmp.lt.s32.totalorder %v76, 127
  %v146 = vsel %vm145, %v142, %v144
  %v147 = vsel %vm145, %v140, %v142
  %v148 = vsel %vm145, %v138, %v140
  %v149 = vsel %vm145, %v144, %v138
  %v150 = vmul.f32 %v148, %v42
  %v151 = vmul.f32 %v147, %v43
  %v152 = vmul.f32 %v146, %v44
  %v153 = vmul.f32 %v149, %v45
  %154 = vrot.lane.b32.xlu0 %v63, 113
  %v155 = vpop.permute.xlu0 %154
  %156 = vrot.lane.b32.xlu0 %v64, 113
  %v157 = vpop.permute.xlu0 %156
  %158 = vrot.lane.b32.xlu0 %v65, 113
  %v159 = vpop.permute.xlu0 %158
  %160 = vrot.lane.b32.xlu0 %v66, 113
  %v161 = vpop.permute.xlu0 %160
  %vm162 = vcmp.lt.s32.totalorder %v76, 113
  %v163 = vsel %vm162, %v159, %v161
  %v164 = vsel %vm162, %v157, %v159
  %v165 = vsel %vm162, %v155, %v157
  %v166 = vsel %vm162, %v161, %v155
  %v167 = vmul.f32 %v165, %v46
  %v168 = vmul.f32 %v164, %v47
  %v169 = vmul.f32 %v163, %v48
  %v170 = vmul.f32 %v166, %v49
  %171 = vrot.lane.b32.xlu0 %v63, 112
  %v172 = vpop.permute.xlu0 %171
  %173 = vrot.lane.b32.xlu0 %v64, 112
  %v174 = vpop.permute.xlu0 %173
  %175 = vrot.lane.b32.xlu0 %v65, 112
  %v176 = vpop.permute.xlu0 %175
  %177 = vrot.lane.b32.xlu0 %v66, 112
  %v178 = vpop.permute.xlu0 %177
  %vm179 = vcmp.lt.s32.totalorder %v76, 112
  %v180 = vsel %vm179, %v176, %v178
  %v181 = vsel %vm179, %v174, %v176
  %v182 = vsel %vm179, %v172, %v174
  %v183 = vsel %vm179, %v178, %v172
  %v184 = vmul.f32 %v182, %v50
  %v185 = vmul.f32 %v181, %v51
  %v186 = vmul.f32 %v180, %v52
  %v187 = vmul.f32 %v183, %v53
  %188 = vrot.lane.b32.xlu0 %v63, 111
  %v189 = vpop.permute.xlu0 %188
  %190 = vrot.lane.b32.xlu0 %v64, 111
  %v191 = vpop.permute.xlu0 %190
  %192 = vrot.lane.b32.xlu0 %v65, 111
  %v193 = vpop.permute.xlu0 %192
  %194 = vrot.lane.b32.xlu0 %v66, 111
  %v195 = vpop.permute.xlu0 %194
  %vm196 = vcmp.lt.s32.totalorder %v76, 111
  %v197 = vsel %vm196, %v193, %v195
  %v198 = vsel %vm196, %v191, %v193
  %v199 = vsel %vm196, %v189, %v191
  %v200 = vsel %vm196, %v195, %v189
  %v201 = vmul.f32 %v199, %v54
  %v202 = vmul.f32 %v198, %v55
  %v203 = vmul.f32 %v197, %v56
  %v204 = vmul.f32 %v200, %v57
  %v205 = vld [vmem:[%s2] sm:$0xff]
  %vm206 = vcmask 654336
  %v208 = vsel %vm206, %v205, 0
  %210 = vmatprep.subr.mxu0 %v83
  %211 = vmatpush1.msra.mxu0 %v82
  %212 = vmatprep.subr.mxu0 %v100
  %213 = vmatpush1.msra.mxu0 %v99
  %214 = vmatprep.subr.mxu0 %v117
  %215 = vmatpush1.msra.mxu0 %v116
  %216 = vmatprep.subr.mxu0 %v134
  %217 = vmatpush1.msra.mxu0 %v133
  %218 = vmatprep.subr.mxu0 %v64
  %219 = vmatpush1.msra.mxu0 %v63
  %220 = vmatprep.subr.mxu0 %v151
  %221 = vmatpush1.msra.mxu0 %v150
  %222 = vmatprep.subr.mxu0 %v168
  %223 = vmatpush1.msra.mxu0 %v167
  %224 = vmatprep.subr.mxu0 %v185
  %225 = vmatpush1.msra.mxu0 %v184
  %226 = vmatprep.subr.mxu0 %v202
  %227 = vmatpush1.msra.mxu0 %v201
  %228 = vmatprep.subr.mxu0 %v59
  %229 = vmatpush1.msra.mxu0 %v58
  %230 = vmatprep.subr.mxu0 0.0
  %231 = vmatpush1.msra.mxu0 0.0
  %232 = vmatprep.subr.mxu0 0.0
  %233 = vmatpush1.msra.mxu0 0.0
  %234 = vmatprep.subr.mxu0 0.0
  %235 = vmatpush1.msra.mxu0 0.0
  %236 = vmatprep.subr.mxu0 0.0
  %237 = vmatpush1.msra.mxu0 0.0
  %238 = vmatprep.subr.mxu0 0.0
  %239 = vmatpush1.msra.mxu0 0.0
  %240 = vmatprep.subr.mxu0 0.0
  %241 = vmatpush1.msra.mxu0 0.0
  %242 = vmatprep.subr.mxu0 0.0
  %243 = vmatpush1.msra.mxu0 0.0
  %244 = vmatprep.subr.mxu0 0.0
  %245 = vmatpush1.msra.mxu0 0.0
  %246 = vmatprep.subr.mxu0 0.0
  %247 = vmatpush1.msra.mxu0 0.0
  %248 = vmatprep.subr.mxu0 0.0
  %249 = vmatpush1.msra.mxu0 0.0
  %250 = vmatprep.subr.mxu0 0.0
  %251 = vmatpush1.msra.mxu0 0.0
  %252 = vmatprep.subr.mxu0 0.0
  %253 = vmatpush1.msra.mxu0 0.0
  %254 = vmatprep.subr.mxu0 0.0
  %255 = vmatpush1.msra.mxu0 0.0
  %256 = vmatprep.subr.mxu0 0.0
  %257 = vmatpush1.msra.mxu0 0.0
  %258 = vmatprep.subr.mxu0 0.0
  %259 = vmatpush1.msra.mxu0 0.0
  %260 = vmatprep.subr.mxu0 0.0
  %261 = vmatpush1.msra.mxu0 0.0
  %262 = vmatprep.subr.mxu0 0.0
  %263 = vmatpush1.msra.mxu0 0.0
  %264 = vmatprep.subr.mxu0 0.0
  %265 = vmatpush1.msra.mxu0 0.0
  %266 = vmatprep.subr.mxu0 0.0
  %267 = vmatpush1.msra.mxu0 0.0
  %268 = vmatprep.subr.mxu0 0.0
  %269 = vmatpush1.msra.mxu0 0.0
  %270 = vmatprep.subr.mxu0 0.0
  %271 = vmatpush1.msra.mxu0 0.0
  %272 = vmatprep.subr.mxu0 0.0
  %273 = vmatpush1.msra.mxu0 0.0
  %274 = vmatprep.mubr.f32.mxu0 0.0
  %275 = vmatmul.mubr.f32.gmra.mrb[0].mxu0 %v208
  %v276 = vpop.f32.mrb[0].mxu0
  %v277 = vadd.f32 0.0, %v276
  %v278 = vpop.f32.mrb[0].mxu0
  %v279 = vadd.f32 0.0, %v278
  %280 = vdwg.mxu0
  %281 = vmatprep.subr.mxu0 %v85
  %282 = vmatpush1.msra.mxu0 %v84
  %283 = vmatprep.subr.mxu0 %v102
  %284 = vmatpush1.msra.mxu0 %v101
  %285 = vmatprep.subr.mxu0 %v119
  %286 = vmatpush1.msra.mxu0 %v118
  %287 = vmatprep.subr.mxu0 %v136
  %288 = vmatpush1.msra.mxu0 %v135
  %289 = vmatprep.subr.mxu0 %v66
  %290 = vmatpush1.msra.mxu0 %v65
  %291 = vmatprep.subr.mxu0 %v153
  %292 = vmatpush1.msra.mxu0 %v152
  %293 = vmatprep.subr.mxu0 %v170
  %294 = vmatpush1.msra.mxu0 %v169
  %295 = vmatprep.subr.mxu0 %v187
  %296 = vmatpush1.msra.mxu0 %v186
  %297 = vmatprep.subr.mxu0 %v204
  %298 = vmatpush1.msra.mxu0 %v203
  %299 = vmatprep.subr.mxu0 %v61
  %300 = vmatpush1.msra.mxu0 %v60
  %301 = vmatprep.subr.mxu0 0.0
  %302 = vmatpush1.msra.mxu0 0.0
  %303 = vmatprep.subr.mxu0 0.0
  %304 = vmatpush1.msra.mxu0 0.0
  %305 = vmatprep.subr.mxu0 0.0
  %306 = vmatpush1.msra.mxu0 0.0
  %307 = vmatprep.subr.mxu0 0.0
  %308 = vmatpush1.msra.mxu0 0.0
  %309 = vmatprep.subr.mxu0 0.0
  %310 = vmatpush1.msra.mxu0 0.0
  %311 = vmatprep.subr.mxu0 0.0
  %312 = vmatpush1.msra.mxu0 0.0
  %313 = vmatprep.subr.mxu0 0.0
  %314 = vmatpush1.msra.mxu0 0.0
  %315 = vmatprep.subr.mxu0 0.0
  %316 = vmatpush1.msra.mxu0 0.0
  %317 = vmatprep.subr.mxu0 0.0
  %318 = vmatpush1.msra.mxu0 0.0
  %319 = vmatprep.subr.mxu0 0.0
  %320 = vmatpush1.msra.mxu0 0.0
  %321 = vmatprep.subr.mxu0 0.0
  %322 = vmatpush1.msra.mxu0 0.0
  %323 = vmatprep.subr.mxu0 0.0
  %324 = vmatpush1.msra.mxu0 0.0
  %325 = vmatprep.subr.mxu0 0.0
  %326 = vmatpush1.msra.mxu0 0.0
  %327 = vmatprep.subr.mxu0 0.0
  %328 = vmatpush1.msra.mxu0 0.0
  %329 = vmatprep.subr.mxu0 0.0
  %330 = vmatpush1.msra.mxu0 0.0
  %331 = vmatprep.subr.mxu0 0.0
  %332 = vmatpush1.msra.mxu0 0.0
  %333 = vmatprep.subr.mxu0 0.0
  %334 = vmatpush1.msra.mxu0 0.0
  %335 = vmatprep.subr.mxu0 0.0
  %336 = vmatpush1.msra.mxu0 0.0
  %337 = vmatprep.subr.mxu0 0.0
  %338 = vmatpush1.msra.mxu0 0.0
  %339 = vmatprep.subr.mxu0 0.0
  %340 = vmatpush1.msra.mxu0 0.0
  %341 = vmatprep.subr.mxu0 0.0
  %342 = vmatpush1.msra.mxu0 0.0
  %343 = vmatprep.subr.mxu0 0.0
  %344 = vmatpush1.msra.mxu0 0.0
  %345 = vmatprep.mubr.f32.mxu0 0.0
  %346 = vmatmul.mubr.f32.gmra.mrb[0].mxu0 %v208
  %v347 = vpop.f32.mrb[0].mxu0
  %v348 = vadd.f32 0.0, %v347
  %v349 = vpop.f32.mrb[0].mxu0
  %v350 = vadd.f32 0.0, %v349
  %351 = vdwg.mxu0
  %v352 = vmax.f32 %v277, 0.0
  %v353 = vmax.f32 %v279, 0.0
  %v354 = vmax.f32 %v348, 0.0
  %v355 = vmax.f32 %v350, 0.0
  %356 = vrot.lane.b32.xlu0 %v352, 17
  %v357 = vpop.permute.xlu0 %356
  %358 = vrot.lane.b32.xlu0 %v353, 17
  %v359 = vpop.permute.xlu0 %358
  %360 = vrot.lane.b32.xlu0 %v354, 17
  %v361 = vpop.permute.xlu0 %360
  %362 = vrot.lane.b32.xlu0 %v355, 17
  %v363 = vpop.permute.xlu0 %362
  %v364 = vsel %vm77, %v361, %v363
  %v365 = vsel %vm77, %v359, %v361
  %v366 = vsel %vm77, %v357, %v359
  %v367 = vsel %vm77, %v363, %v357
  %v368 = vmul.f32 %v367, %v26
  %v369 = vmul.f32 %v366, %v27
  %v370 = vmul.f32 %v365, %v28
  %v371 = vmul.f32 %v364, %v29
  %372 = vrot.lane.b32.xlu0 %v352, 16
  %v373 = vpop.permute.xlu0 %372
  %374 = vrot.lane.b32.xlu0 %v353, 16
  %v375 = vpop.permute.xlu0 %374
  %376 = vrot.lane.b32.xlu0 %v354, 16
  %v377 = vpop.permute.xlu0 %376
  %378 = vrot.lane.b32.xlu0 %v355, 16
  %v379 = vpop.permute.xlu0 %378
  %v380 = vsel %vm94, %v377, %v379
  %v381 = vsel %vm94, %v375, %v377
  %v382 = vsel %vm94, %v373, %v375
  %v383 = vsel %vm94, %v379, %v373
  %v384 = vmul.f32 %v383, %v30
  %v385 = vmul.f32 %v382, %v31
  %v386 = vmul.f32 %v381, %v32
  %v387 = vmul.f32 %v380, %v33
  %388 = vrot.lane.b32.xlu0 %v352, 15
  %v389 = vpop.permute.xlu0 %388
  %390 = vrot.lane.b32.xlu0 %v353, 15
  %v391 = vpop.permute.xlu0 %390
  %392 = vrot.lane.b32.xlu0 %v354, 15
  %v393 = vpop.permute.xlu0 %392
  %394 = vrot.lane.b32.xlu0 %v355, 15
  %v395 = vpop.permute.xlu0 %394
  %v396 = vsel %vm111, %v393, %v395
  %v397 = vsel %vm111, %v391, %v393
  %v398 = vsel %vm111, %v389, %v391
  %v399 = vsel %vm111, %v395, %v389
  %v400 = vmul.f32 %v399, %v34
  %v401 = vmul.f32 %v398, %v35
  %v402 = vmul.f32 %v397, %v36
  %v403 = vmul.f32 %v396, %v37
  %404 = vrot.lane.b32.xlu0 %v352, 1
  %v405 = vpop.permute.xlu0 %404
  %406 = vrot.lane.b32.xlu0 %v353, 1
  %v407 = vpop.permute.xlu0 %406
  %408 = vrot.lane.b32.xlu0 %v354, 1
  %v409 = vpop.permute.xlu0 %408
  %410 = vrot.lane.b32.xlu0 %v355, 1
  %v411 = vpop.permute.xlu0 %410
  %v412 = vsel %vm128, %v409, %v411
  %v413 = vsel %vm128, %v407, %v409
  %v414 = vsel %vm128, %v405, %v407
  %v415 = vsel %vm128, %v411, %v405
  %v416 = vmul.f32 %v415, %v38
  %v417 = vmul.f32 %v414, %v39
  %v418 = vmul.f32 %v413, %v40
  %v419 = vmul.f32 %v412, %v41
  %420 = vrot.lane.b32.xlu0 %v352, 127
  %v421 = vpop.permute.xlu0 %420
  %422 = vrot.lane.b32.xlu0 %v353, 127
  %v423 = vpop.permute.xlu0 %422
  %424 = vrot.lane.b32.xlu0 %v354, 127
  %v425 = vpop.permute.xlu0 %424
  %426 = vrot.lane.b32.xlu0 %v355, 127
  %v427 = vpop.permute.xlu0 %426
  %v428 = vsel %vm145, %v425, %v427
  %v429 = vsel %vm145, %v423, %v425
  %v430 = vsel %vm145, %v421, %v423
  %v431 = vsel %vm145, %v427, %v421
  %v432 = vmul.f32 %v430, %v42
  %v433 = vmul.f32 %v429, %v43
  %v434 = vmul.f32 %v428, %v44
  %v435 = vmul.f32 %v431, %v45
  %436 = vrot.lane.b32.xlu0 %v352, 113
  %v437 = vpop.permute.xlu0 %436
  %438 = vrot.lane.b32.xlu0 %v353, 113
  %v439 = vpop.permute.xlu0 %438
  %440 = vrot.lane.b32.xlu0 %v354, 113
  %v441 = vpop.permute.xlu0 %440
  %442 = vrot.lane.b32.xlu0 %v355, 113
  %v443 = vpop.permute.xlu0 %442
  %v444 = vsel %vm162, %v441, %v443
  %v445 = vsel %vm162, %v439, %v441
  %v446 = vsel %vm162, %v437, %v439
  %v447 = vsel %vm162, %v443, %v437
  %v448 = vmul.f32 %v446, %v46
  %v449 = vmul.f32 %v445, %v47
  %v450 = vmul.f32 %v444, %v48
  %v451 = vmul.f32 %v447, %v49
  %452 = vrot.lane.b32.xlu0 %v352, 112
  %v453 = vpop.permute.xlu0 %452
  %454 = vrot.lane.b32.xlu0 %v353, 112
  %v455 = vpop.permute.xlu0 %454
  %456 = vrot.lane.b32.xlu0 %v354, 112
  %v457 = vpop.permute.xlu0 %456
  %458 = vrot.lane.b32.xlu0 %v355, 112
  %v459 = vpop.permute.xlu0 %458
  %v460 = vsel %vm179, %v457, %v459
  %v461 = vsel %vm179, %v455, %v457
  %v462 = vsel %vm179, %v453, %v455
  %v463 = vsel %vm179, %v459, %v453
  %v464 = vmul.f32 %v462, %v50
  %v465 = vmul.f32 %v461, %v51
  %v466 = vmul.f32 %v460, %v52
  %v467 = vmul.f32 %v463, %v53
  %468 = vrot.lane.b32.xlu0 %v352, 111
  %v469 = vpop.permute.xlu0 %468
  %470 = vrot.lane.b32.xlu0 %v353, 111
  %v471 = vpop.permute.xlu0 %470
  %472 = vrot.lane.b32.xlu0 %v354, 111
  %v473 = vpop.permute.xlu0 %472
  %474 = vrot.lane.b32.xlu0 %v355, 111
  %v475 = vpop.permute.xlu0 %474
  %v476 = vsel %vm196, %v473, %v475
  %v477 = vsel %vm196, %v471, %v473
  %v478 = vsel %vm196, %v469, %v471
  %v479 = vsel %vm196, %v475, %v469
  %v480 = vmul.f32 %v478, %v54
  %v481 = vmul.f32 %v477, %v55
  %v482 = vmul.f32 %v476, %v56
  %v483 = vmul.f32 %v479, %v57
  %v484 = vld [vmem:[%s3] sm:$0xff]
  %v486 = vsel %vm206, %v484, 0
  %488 = vmatprep.subr.mxu0 %v369
  %489 = vmatpush1.msra.mxu0 %v368
  %490 = vmatprep.subr.mxu0 %v385
  %491 = vmatpush1.msra.mxu0 %v384
  %492 = vmatprep.subr.mxu0 %v401
  %493 = vmatpush1.msra.mxu0 %v400
  %494 = vmatprep.subr.mxu0 %v417
  %495 = vmatpush1.msra.mxu0 %v416
  %496 = vmatprep.subr.mxu0 %v353
  %497 = vmatpush1.msra.mxu0 %v352
  %498 = vmatprep.subr.mxu0 %v433
  %499 = vmatpush1.msra.mxu0 %v432
  %500 = vmatprep.subr.mxu0 %v449
  %501 = vmatpush1.msra.mxu0 %v448
  %502 = vmatprep.subr.mxu0 %v465
  %503 = vmatpush1.msra.mxu0 %v464
  %504 = vmatprep.subr.mxu0 %v481
  %505 = vmatpush1.msra.mxu0 %v480
  %506 = vmatprep.subr.mxu0 %v59
  %507 = vmatpush1.msra.mxu0 %v58
  %508 = vmatprep.subr.mxu0 0.0
  %509 = vmatpush1.msra.mxu0 0.0
  %510 = vmatprep.subr.mxu0 0.0
  %511 = vmatpush1.msra.mxu0 0.0
  %512 = vmatprep.subr.mxu0 0.0
  %513 = vmatpush1.msra.mxu0 0.0
  %514 = vmatprep.subr.mxu0 0.0
  %515 = vmatpush1.msra.mxu0 0.0
  %516 = vmatprep.subr.mxu0 0.0
  %517 = vmatpush1.msra.mxu0 0.0
  %518 = vmatprep.subr.mxu0 0.0
  %519 = vmatpush1.msra.mxu0 0.0
  %520 = vmatprep.subr.mxu0 0.0
  %521 = vmatpush1.msra.mxu0 0.0
  %522 = vmatprep.subr.mxu0 0.0
  %523 = vmatpush1.msra.mxu0 0.0
  %524 = vmatprep.subr.mxu0 0.0
  %525 = vmatpush1.msra.mxu0 0.0
  %526 = vmatprep.subr.mxu0 0.0
  %527 = vmatpush1.msra.mxu0 0.0
  %528 = vmatprep.subr.mxu0 0.0
  %529 = vmatpush1.msra.mxu0 0.0
  %530 = vmatprep.subr.mxu0 0.0
  %531 = vmatpush1.msra.mxu0 0.0
  %532 = vmatprep.subr.mxu0 0.0
  %533 = vmatpush1.msra.mxu0 0.0
  %534 = vmatprep.subr.mxu0 0.0
  %535 = vmatpush1.msra.mxu0 0.0
  %536 = vmatprep.subr.mxu0 0.0
  %537 = vmatpush1.msra.mxu0 0.0
  %538 = vmatprep.subr.mxu0 0.0
  %539 = vmatpush1.msra.mxu0 0.0
  %540 = vmatprep.subr.mxu0 0.0
  %541 = vmatpush1.msra.mxu0 0.0
  %542 = vmatprep.subr.mxu0 0.0
  %543 = vmatpush1.msra.mxu0 0.0
  %544 = vmatprep.subr.mxu0 0.0
  %545 = vmatpush1.msra.mxu0 0.0
  %546 = vmatprep.subr.mxu0 0.0
  %547 = vmatpush1.msra.mxu0 0.0
  %548 = vmatprep.subr.mxu0 0.0
  %549 = vmatpush1.msra.mxu0 0.0
  %550 = vmatprep.subr.mxu0 0.0
  %551 = vmatpush1.msra.mxu0 0.0
  %552 = vmatprep.mubr.f32.mxu0 0.0
  %553 = vmatmul.mubr.f32.gmra.mrb[0].mxu0 %v486
  %v554 = vpop.f32.mrb[0].mxu0
  %v555 = vadd.f32 0.0, %v554
  %v556 = vpop.f32.mrb[0].mxu0
  %v557 = vadd.f32 0.0, %v556
  %558 = vdwg.mxu0
  %559 = vmatprep.subr.mxu0 %v371
  %560 = vmatpush1.msra.mxu0 %v370
  %561 = vmatprep.subr.mxu0 %v387
  %562 = vmatpush1.msra.mxu0 %v386
  %563 = vmatprep.subr.mxu0 %v403
  %564 = vmatpush1.msra.mxu0 %v402
  %565 = vmatprep.subr.mxu0 %v419
  %566 = vmatpush1.msra.mxu0 %v418
  %567 = vmatprep.subr.mxu0 %v355
  %568 = vmatpush1.msra.mxu0 %v354
  %569 = vmatprep.subr.mxu0 %v435
  %570 = vmatpush1.msra.mxu0 %v434
  %571 = vmatprep.subr.mxu0 %v451
  %572 = vmatpush1.msra.mxu0 %v450
  %573 = vmatprep.subr.mxu0 %v467
  %574 = vmatpush1.msra.mxu0 %v466
  %575 = vmatprep.subr.mxu0 %v483
  %576 = vmatpush1.msra.mxu0 %v482
  %577 = vmatprep.subr.mxu0 %v61
  %578 = vmatpush1.msra.mxu0 %v60
  %579 = vmatprep.subr.mxu0 0.0
  %580 = vmatpush1.msra.mxu0 0.0
  %581 = vmatprep.subr.mxu0 0.0
  %582 = vmatpush1.msra.mxu0 0.0
  %583 = vmatprep.subr.mxu0 0.0
  %584 = vmatpush1.msra.mxu0 0.0
  %585 = vmatprep.subr.mxu0 0.0
  %586 = vmatpush1.msra.mxu0 0.0
  %587 = vmatprep.subr.mxu0 0.0
  %588 = vmatpush1.msra.mxu0 0.0
  %589 = vmatprep.subr.mxu0 0.0
  %590 = vmatpush1.msra.mxu0 0.0
  %591 = vmatprep.subr.mxu0 0.0
  %592 = vmatpush1.msra.mxu0 0.0
  %593 = vmatprep.subr.mxu0 0.0
  %594 = vmatpush1.msra.mxu0 0.0
  %595 = vmatprep.subr.mxu0 0.0
  %596 = vmatpush1.msra.mxu0 0.0
  %597 = vmatprep.subr.mxu0 0.0
  %598 = vmatpush1.msra.mxu0 0.0
  %599 = vmatprep.subr.mxu0 0.0
  %600 = vmatpush1.msra.mxu0 0.0
  %601 = vmatprep.subr.mxu0 0.0
  %602 = vmatpush1.msra.mxu0 0.0
  %603 = vmatprep.subr.mxu0 0.0
  %604 = vmatpush1.msra.mxu0 0.0
  %605 = vmatprep.subr.mxu0 0.0
  %606 = vmatpush1.msra.mxu0 0.0
  %607 = vmatprep.subr.mxu0 0.0
  %608 = vmatpush1.msra.mxu0 0.0
  %609 = vmatprep.subr.mxu0 0.0
  %610 = vmatpush1.msra.mxu0 0.0
  %611 = vmatprep.subr.mxu0 0.0
  %612 = vmatpush1.msra.mxu0 0.0
  %613 = vmatprep.subr.mxu0 0.0
  %614 = vmatpush1.msra.mxu0 0.0
  %615 = vmatprep.subr.mxu0 0.0
  %616 = vmatpush1.msra.mxu0 0.0
  %617 = vmatprep.subr.mxu0 0.0
  %618 = vmatpush1.msra.mxu0 0.0
  %619 = vmatprep.subr.mxu0 0.0
  %620 = vmatpush1.msra.mxu0 0.0
  %621 = vmatprep.subr.mxu0 0.0
  %622 = vmatpush1.msra.mxu0 0.0
  %623 = vmatprep.mubr.f32.mxu0 0.0
  %624 = vmatmul.mubr.f32.gmra.mrb[0].mxu0 %v486
  %v625 = vpop.f32.mrb[0].mxu0
  %v626 = vadd.f32 0.0, %v625
  %v627 = vpop.f32.mrb[0].mxu0
  %v628 = vadd.f32 0.0, %v627
  %629 = vdwg.mxu0
  %630 = vst [vmem:[%s4] sm:$0xff] %v555
  %631 = vst [vmem:[%s4 + $0x8] sm:$0xff] %v557
  %s632 = scalar_lea.vmem %s4, 16
  %633 = vst [vmem:[%s632] sm:$0xff] %v626
  %634 = vst [vmem:[%s632 + $0x8] sm:$0xff] %v628
  // Predicated region
  $region18: #{_fused_forward.1} parent=0 // pred_check
    _
  $region19: #{_fused_forward.1} parent=0 // pred_check_branch
    %636 = sbr.rel (0) target = $region21
  $region20: #{_fused_forward.1} parent=0 // pred_region
    _
  $region21: #{_fused_forward.1} parent=0 // pred_fallthru
    _
  // Predicated region
  $region22: #{_fused_forward.1} parent=0 // pred_check
    _
  $region23: #{_fused_forward.1} parent=0 // pred_check_branch
    %638 = sbr.rel (0) target = $region25
  $region24: #{_fused_forward.1} parent=0 // pred_region
    _
  $region25: #{_fused_forward.1} parent=0 // pred_fallthru
    _

</llo_original>
